<compile_context>
chip_gen: v6e
topology: v6e:2x2x1
jax: 0.10.0
libtpu: 0.0.40
codegen_flags: <defaults>
</compile_context>

<pallas_src>
import jax
import jax.numpy as jnp
from jax.experimental import pallas as pl
from jax.experimental.pallas import tpu as pltpu

_HIDDEN = 16


def _mlp_kernel(w1_ref, b1_ref, w2_ref, b2_ref, x_ref, o_ref):
    # x_ref / o_ref: (TM, 128) lane-dense f32 blocks of scalar inputs / outputs.
    # w1_ref, b1_ref, w2_ref: (16,) f32 in SMEM; b2_ref: (1,) f32 in SMEM.
    x = x_ref[...]
    acc = jnp.zeros_like(x)
    # 16 hidden units, fully unrolled elementwise accumulation (VPU only, no MXU).
    for j in range(_HIDDEN):
        h = jnp.maximum(x * w1_ref[j] + b1_ref[j], 0.0)   # Linear(1,16) + ReLU, unit j
        acc = acc + w2_ref[j] * h                          # Linear(16,1) contribution
    z = acc + b2_ref[0]
    # Exact sigmoid: exp on the EUP, exact divide (memory-bound kernel -> divide is free).
    o_ref[...] = 1.0 / (1.0 + jnp.exp(-z))


def binary_club_forward(x, w1, b1, w2, b2, *, tile_rows=512):
    """Forward pass of BinaryCLUB.prob_of_1_net via one Pallas kernel call.

    Args:
      x:  (N, 1) float32
      w1: (1, 16) float32   (transposed PyTorch Linear weight)
      b1: (16,)   float32
      w2: (16, 1) float32   (transposed PyTorch Linear weight)
      b2: (1,)    float32
      tile_rows: rows (of 128 lanes) per grid step; multiple of 8.
    Returns:
      (N, 1) float32 in (0, 1)
    """
    n = x.shape[0]
    xf = x.reshape(-1).astype(jnp.float32)

    # Lane-dense layout: pad N up so it reshapes to (rows, 128) with rows a
    # multiple of the tile, keeping every block a multiple of (8, 128).
    rows_needed = -(-n // 128)                              # ceil(n / 128)
    tm = min(int(tile_rows), max(8, (-(-rows_needed // 8)) * 8))
    rows = (-(-rows_needed // tm)) * tm
    total = rows * 128

    x2 = jnp.pad(xf, (0, total - n)).reshape(rows, 128)

    w1f = w1.reshape(_HIDDEN).astype(jnp.float32)
    b1f = b1.reshape(_HIDDEN).astype(jnp.float32)
    w2f = w2.reshape(_HIDDEN).astype(jnp.float32)
    b2f = b2.reshape(1).astype(jnp.float32)

    smem_spec = pl.BlockSpec(memory_space=pltpu.MemorySpace.SMEM)

    out2 = pl.pallas_call(
        _mlp_kernel,
        out_shape=jax.ShapeDtypeStruct((rows, 128), jnp.float32),
        grid=(rows // tm,),
        in_specs=[
            smem_spec,  # w1
            smem_spec,  # b1
            smem_spec,  # w2
            smem_spec,  # b2
            pl.BlockSpec((tm, 128), lambda i: (i, 0)),      # x tile
        ],
        out_specs=pl.BlockSpec((tm, 128), lambda i: (i, 0)),
        compiler_params=pltpu.CompilerParams(
            dimension_semantics=("parallel",),
        ),
    )(w1f, b1f, w2f, b2f, x2)

    # Drop the padded tail and restore the (N, 1) layout of the PyTorch module.
    return out2.reshape(total, 1)[:n]


def _init_params(key):
    """Deterministic init matching PyTorch nn.Linear default (U(-1/sqrt(fan_in), 1/sqrt(fan_in)))."""
    k1, k2, k3, k4 = jax.random.split(key, 4)
    bound1 = 1.0 / jnp.sqrt(1.0)     # fan_in = 1
    bound2 = 1.0 / jnp.sqrt(16.0)    # fan_in = 16
    w1 = jax.random.uniform(k1, (1, _HIDDEN), jnp.float32, -bound1, bound1)
    b1 = jax.random.uniform(k2, (_HIDDEN,), jnp.float32, -bound1, bound1)
    w2 = jax.random.uniform(k3, (_HIDDEN, 1), jnp.float32, -bound2, bound2)
    b2 = jax.random.uniform(k4, (1,), jnp.float32, -bound2, bound2)
    return w1, b1, w2, b2


def _reference(x, w1, b1, w2, b2):
    h = jnp.maximum(x @ w1 + b1[None, :], 0.0)
    return jax.nn.sigmoid(h @ w2 + b2[None, :])


if __name__ == "__main__":
    key = jax.random.PRNGKey(0)
    kx1, kx2, kp = jax.random.split(key, 3)
    w1, b1, w2, b2 = _init_params(kp)

    # Case 1: tiny batch (single (8,128) tile, exercises padding of a nearly-empty slab).
    n_small = 8
    x_small = jax.random.normal(kx1, (n_small, 1), jnp.float32)
    out_small = jax.block_until_ready(binary_club_forward(x_small, w1, b1, w2, b2))
    ref_small = _reference(x_small, w1, b1, w2, b2)
    assert out_small.shape == (n_small, 1)
    assert jnp.allclose(out_small, ref_small, atol=1e-5, rtol=1e-5)

    # Case 2: larger batch with a small tile so the 1-D grid runs multiple steps
    # (3000 scalars -> 24 lane-dense rows -> 3 tiles of (8, 128)).
    n_big = 3000
    x_big = jax.random.normal(kx2, (n_big, 1), jnp.float32)
    out_big = jax.block_until_ready(
        binary_club_forward(x_big, w1, b1, w2, b2, tile_rows=8))
    ref_big = _reference(x_big, w1, b1, w2, b2)
    assert out_big.shape == (n_big, 1)
    assert jnp.allclose(out_big, ref_big, atol=1e-5, rtol=1e-5)

    print("KERNEL_OK")
</pallas_src>

<mosaic_0001>
module attributes {stable_mosaic.version = 11 : i64} {
  func.func @_mlp_kernel(%arg0: i32, %arg1: memref<16xf32, #tpu.memory_space<smem>>, %arg2: memref<16xf32, #tpu.memory_space<smem>>, %arg3: memref<16xf32, #tpu.memory_space<smem>>, %arg4: memref<1xf32, #tpu.memory_space<smem>>, %arg5: memref<8x128xf32, #tpu.memory_space<vmem>>, %arg6: memref<8x128xf32, #tpu.memory_space<vmem>>) attributes {dimension_semantics = [#tpu.dimension_semantics<parallel>], iteration_bounds = array<i64: 1>, scalar_prefetch = 0 : i64, scratch_operands = 0 : i64, tpu.core_type = #tpu.core_type<tc>, window_params = [{transform_indices = @transform_0, window_bounds = array<i64: 16>}, {transform_indices = @transform_1, window_bounds = array<i64: 16>}, {transform_indices = @transform_2, window_bounds = array<i64: 16>}, {transform_indices = @transform_3, window_bounds = array<i64: 1>}, {transform_indices = @transform_4, window_bounds = array<i64: 8, 128>}, {transform_indices = @transform_5, window_bounds = array<i64: 8, 128>}]} {
    %c0 = arith.constant 0 : index
    %c0_0 = arith.constant 0 : index
    %0 = vector.load %arg5[%c0, %c0_0] : memref<8x128xf32, #tpu.memory_space<vmem>>, vector<8x128xf32>
    %cst = arith.constant 0.000000e+00 : f32
    %1 = vector.broadcast %cst : f32 to vector<8x128xf32>
    %c0_1 = arith.constant 0 : index
    %2 = memref.load %arg1[%c0_1] : memref<16xf32, #tpu.memory_space<smem>>
    %3 = vector.broadcast %2 : f32 to vector<8x128xf32>
    %4 = arith.mulf %0, %3 : vector<8x128xf32>
    %c0_2 = arith.constant 0 : index
    %5 = memref.load %arg2[%c0_2] : memref<16xf32, #tpu.memory_space<smem>>
    %6 = vector.broadcast %5 : f32 to vector<8x128xf32>
    %7 = arith.addf %4, %6 : vector<8x128xf32>
    %cst_3 = arith.constant 0.000000e+00 : f32
    %8 = vector.broadcast %cst_3 : f32 to vector<8x128xf32>
    %9 = arith.maximumf %7, %8 : vector<8x128xf32>
    %c0_4 = arith.constant 0 : index
    %10 = memref.load %arg3[%c0_4] : memref<16xf32, #tpu.memory_space<smem>>
    %11 = vector.broadcast %10 : f32 to vector<8x128xf32>
    %12 = arith.mulf %11, %9 : vector<8x128xf32>
    %13 = arith.addf %1, %12 : vector<8x128xf32>
    %c1 = arith.constant 1 : index
    %14 = memref.load %arg1[%c1] : memref<16xf32, #tpu.memory_space<smem>>
    %15 = vector.broadcast %14 : f32 to vector<8x128xf32>
    %16 = arith.mulf %0, %15 : vector<8x128xf32>
    %c1_5 = arith.constant 1 : index
    %17 = memref.load %arg2[%c1_5] : memref<16xf32, #tpu.memory_space<smem>>
    %18 = vector.broadcast %17 : f32 to vector<8x128xf32>
    %19 = arith.addf %16, %18 : vector<8x128xf32>
    %cst_6 = arith.constant 0.000000e+00 : f32
    %20 = vector.broadcast %cst_6 : f32 to vector<8x128xf32>
    %21 = arith.maximumf %19, %20 : vector<8x128xf32>
    %c1_7 = arith.constant 1 : index
    %22 = memref.load %arg3[%c1_7] : memref<16xf32, #tpu.memory_space<smem>>
    %23 = vector.broadcast %22 : f32 to vector<8x128xf32>
    %24 = arith.mulf %23, %21 : vector<8x128xf32>
    %25 = arith.addf %13, %24 : vector<8x128xf32>
    %c2 = arith.constant 2 : index
    %26 = memref.load %arg1[%c2] : memref<16xf32, #tpu.memory_space<smem>>
    %27 = vector.broadcast %26 : f32 to vector<8x128xf32>
    %28 = arith.mulf %0, %27 : vector<8x128xf32>
    %c2_8 = arith.constant 2 : index
    %29 = memref.load %arg2[%c2_8] : memref<16xf32, #tpu.memory_space<smem>>
    %30 = vector.broadcast %29 : f32 to vector<8x128xf32>
    %31 = arith.addf %28, %30 : vector<8x128xf32>
    %cst_9 = arith.constant 0.000000e+00 : f32
    %32 = vector.broadcast %cst_9 : f32 to vector<8x128xf32>
    %33 = arith.maximumf %31, %32 : vector<8x128xf32>
    %c2_10 = arith.constant 2 : index
    %34 = memref.load %arg3[%c2_10] : memref<16xf32, #tpu.memory_space<smem>>
    %35 = vector.broadcast %34 : f32 to vector<8x128xf32>
    %36 = arith.mulf %35, %33 : vector<8x128xf32>
    %37 = arith.addf %25, %36 : vector<8x128xf32>
    %c3 = arith.constant 3 : index
    %38 = memref.load %arg1[%c3] : memref<16xf32, #tpu.memory_space<smem>>
    %39 = vector.broadcast %38 : f32 to vector<8x128xf32>
    %40 = arith.mulf %0, %39 : vector<8x128xf32>
    %c3_11 = arith.constant 3 : index
    %41 = memref.load %arg2[%c3_11] : memref<16xf32, #tpu.memory_space<smem>>
    %42 = vector.broadcast %41 : f32 to vector<8x128xf32>
    %43 = arith.addf %40, %42 : vector<8x128xf32>
    %cst_12 = arith.constant 0.000000e+00 : f32
    %44 = vector.broadcast %cst_12 : f32 to vector<8x128xf32>
    %45 = arith.maximumf %43, %44 : vector<8x128xf32>
    %c3_13 = arith.constant 3 : index
    %46 = memref.load %arg3[%c3_13] : memref<16xf32, #tpu.memory_space<smem>>
    %47 = vector.broadcast %46 : f32 to vector<8x128xf32>
    %48 = arith.mulf %47, %45 : vector<8x128xf32>
    %49 = arith.addf %37, %48 : vector<8x128xf32>
    %c4 = arith.constant 4 : index
    %50 = memref.load %arg1[%c4] : memref<16xf32, #tpu.memory_space<smem>>
    %51 = vector.broadcast %50 : f32 to vector<8x128xf32>
    %52 = arith.mulf %0, %51 : vector<8x128xf32>
    %c4_14 = arith.constant 4 : index
    %53 = memref.load %arg2[%c4_14] : memref<16xf32, #tpu.memory_space<smem>>
    %54 = vector.broadcast %53 : f32 to vector<8x128xf32>
    %55 = arith.addf %52, %54 : vector<8x128xf32>
    %cst_15 = arith.constant 0.000000e+00 : f32
    %56 = vector.broadcast %cst_15 : f32 to vector<8x128xf32>
    %57 = arith.maximumf %55, %56 : vector<8x128xf32>
    %c4_16 = arith.constant 4 : index
    %58 = memref.load %arg3[%c4_16] : memref<16xf32, #tpu.memory_space<smem>>
    %59 = vector.broadcast %58 : f32 to vector<8x128xf32>
    %60 = arith.mulf %59, %57 : vector<8x128xf32>
    %61 = arith.addf %49, %60 : vector<8x128xf32>
    %c5 = arith.constant 5 : index
    %62 = memref.load %arg1[%c5] : memref<16xf32, #tpu.memory_space<smem>>
    %63 = vector.broadcast %62 : f32 to vector<8x128xf32>
    %64 = arith.mulf %0, %63 : vector<8x128xf32>
    %c5_17 = arith.constant 5 : index
    %65 = memref.load %arg2[%c5_17] : memref<16xf32, #tpu.memory_space<smem>>
    %66 = vector.broadcast %65 : f32 to vector<8x128xf32>
    %67 = arith.addf %64, %66 : vector<8x128xf32>
    %cst_18 = arith.constant 0.000000e+00 : f32
    %68 = vector.broadcast %cst_18 : f32 to vector<8x128xf32>
    %69 = arith.maximumf %67, %68 : vector<8x128xf32>
    %c5_19 = arith.constant 5 : index
    %70 = memref.load %arg3[%c5_19] : memref<16xf32, #tpu.memory_space<smem>>
    %71 = vector.broadcast %70 : f32 to vector<8x128xf32>
    %72 = arith.mulf %71, %69 : vector<8x128xf32>
    %73 = arith.addf %61, %72 : vector<8x128xf32>
    %c6 = arith.constant 6 : index
    %74 = memref.load %arg1[%c6] : memref<16xf32, #tpu.memory_space<smem>>
    %75 = vector.broadcast %74 : f32 to vector<8x128xf32>
    %76 = arith.mulf %0, %75 : vector<8x128xf32>
    %c6_20 = arith.constant 6 : index
    %77 = memref.load %arg2[%c6_20] : memref<16xf32, #tpu.memory_space<smem>>
    %78 = vector.broadcast %77 : f32 to vector<8x128xf32>
    %79 = arith.addf %76, %78 : vector<8x128xf32>
    %cst_21 = arith.constant 0.000000e+00 : f32
    %80 = vector.broadcast %cst_21 : f32 to vector<8x128xf32>
    %81 = arith.maximumf %79, %80 : vector<8x128xf32>
    %c6_22 = arith.constant 6 : index
    %82 = memref.load %arg3[%c6_22] : memref<16xf32, #tpu.memory_space<smem>>
    %83 = vector.broadcast %82 : f32 to vector<8x128xf32>
    %84 = arith.mulf %83, %81 : vector<8x128xf32>
    %85 = arith.addf %73, %84 : vector<8x128xf32>
    %c7 = arith.constant 7 : index
    %86 = memref.load %arg1[%c7] : memref<16xf32, #tpu.memory_space<smem>>
    %87 = vector.broadcast %86 : f32 to vector<8x128xf32>
    %88 = arith.mulf %0, %87 : vector<8x128xf32>
    %c7_23 = arith.constant 7 : index
    %89 = memref.load %arg2[%c7_23] : memref<16xf32, #tpu.memory_space<smem>>
    %90 = vector.broadcast %89 : f32 to vector<8x128xf32>
    %91 = arith.addf %88, %90 : vector<8x128xf32>
    %cst_24 = arith.constant 0.000000e+00 : f32
    %92 = vector.broadcast %cst_24 : f32 to vector<8x128xf32>
    %93 = arith.maximumf %91, %92 : vector<8x128xf32>
    %c7_25 = arith.constant 7 : index
    %94 = memref.load %arg3[%c7_25] : memref<16xf32, #tpu.memory_space<smem>>
    %95 = vector.broadcast %94 : f32 to vector<8x128xf32>
    %96 = arith.mulf %95, %93 : vector<8x128xf32>
    %97 = arith.addf %85, %96 : vector<8x128xf32>
    %c8 = arith.constant 8 : index
    %98 = memref.load %arg1[%c8] : memref<16xf32, #tpu.memory_space<smem>>
    %99 = vector.broadcast %98 : f32 to vector<8x128xf32>
    %100 = arith.mulf %0, %99 : vector<8x128xf32>
    %c8_26 = arith.constant 8 : index
    %101 = memref.load %arg2[%c8_26] : memref<16xf32, #tpu.memory_space<smem>>
    %102 = vector.broadcast %101 : f32 to vector<8x128xf32>
    %103 = arith.addf %100, %102 : vector<8x128xf32>
    %cst_27 = arith.constant 0.000000e+00 : f32
    %104 = vector.broadcast %cst_27 : f32 to vector<8x128xf32>
    %105 = arith.maximumf %103, %104 : vector<8x128xf32>
    %c8_28 = arith.constant 8 : index
    %106 = memref.load %arg3[%c8_28] : memref<16xf32, #tpu.memory_space<smem>>
    %107 = vector.broadcast %106 : f32 to vector<8x128xf32>
    %108 = arith.mulf %107, %105 : vector<8x128xf32>
    %109 = arith.addf %97, %108 : vector<8x128xf32>
    %c9 = arith.constant 9 : index
    %110 = memref.load %arg1[%c9] : memref<16xf32, #tpu.memory_space<smem>>
    %111 = vector.broadcast %110 : f32 to vector<8x128xf32>
    %112 = arith.mulf %0, %111 : vector<8x128xf32>
    %c9_29 = arith.constant 9 : index
    %113 = memref.load %arg2[%c9_29] : memref<16xf32, #tpu.memory_space<smem>>
    %114 = vector.broadcast %113 : f32 to vector<8x128xf32>
    %115 = arith.addf %112, %114 : vector<8x128xf32>
    %cst_30 = arith.constant 0.000000e+00 : f32
    %116 = vector.broadcast %cst_30 : f32 to vector<8x128xf32>
    %117 = arith.maximumf %115, %116 : vector<8x128xf32>
    %c9_31 = arith.constant 9 : index
    %118 = memref.load %arg3[%c9_31] : memref<16xf32, #tpu.memory_space<smem>>
    %119 = vector.broadcast %118 : f32 to vector<8x128xf32>
    %120 = arith.mulf %119, %117 : vector<8x128xf32>
    %121 = arith.addf %109, %120 : vector<8x128xf32>
    %c10 = arith.constant 10 : index
    %122 = memref.load %arg1[%c10] : memref<16xf32, #tpu.memory_space<smem>>
    %123 = vector.broadcast %122 : f32 to vector<8x128xf32>
    %124 = arith.mulf %0, %123 : vector<8x128xf32>
    %c10_32 = arith.constant 10 : index
    %125 = memref.load %arg2[%c10_32] : memref<16xf32, #tpu.memory_space<smem>>
    %126 = vector.broadcast %125 : f32 to vector<8x128xf32>
    %127 = arith.addf %124, %126 : vector<8x128xf32>
    %cst_33 = arith.constant 0.000000e+00 : f32
    %128 = vector.broadcast %cst_33 : f32 to vector<8x128xf32>
    %129 = arith.maximumf %127, %128 : vector<8x128xf32>
    %c10_34 = arith.constant 10 : index
    %130 = memref.load %arg3[%c10_34] : memref<16xf32, #tpu.memory_space<smem>>
    %131 = vector.broadcast %130 : f32 to vector<8x128xf32>
    %132 = arith.mulf %131, %129 : vector<8x128xf32>
    %133 = arith.addf %121, %132 : vector<8x128xf32>
    %c11 = arith.constant 11 : index
    %134 = memref.load %arg1[%c11] : memref<16xf32, #tpu.memory_space<smem>>
    %135 = vector.broadcast %134 : f32 to vector<8x128xf32>
    %136 = arith.mulf %0, %135 : vector<8x128xf32>
    %c11_35 = arith.constant 11 : index
    %137 = memref.load %arg2[%c11_35] : memref<16xf32, #tpu.memory_space<smem>>
    %138 = vector.broadcast %137 : f32 to vector<8x128xf32>
    %139 = arith.addf %136, %138 : vector<8x128xf32>
    %cst_36 = arith.constant 0.000000e+00 : f32
    %140 = vector.broadcast %cst_36 : f32 to vector<8x128xf32>
    %141 = arith.maximumf %139, %140 : vector<8x128xf32>
    %c11_37 = arith.constant 11 : index
    %142 = memref.load %arg3[%c11_37] : memref<16xf32, #tpu.memory_space<smem>>
    %143 = vector.broadcast %142 : f32 to vector<8x128xf32>
    %144 = arith.mulf %143, %141 : vector<8x128xf32>
    %145 = arith.addf %133, %144 : vector<8x128xf32>
    %c12 = arith.constant 12 : index
    %146 = memref.load %arg1[%c12] : memref<16xf32, #tpu.memory_space<smem>>
    %147 = vector.broadcast %146 : f32 to vector<8x128xf32>
    %148 = arith.mulf %0, %147 : vector<8x128xf32>
    %c12_38 = arith.constant 12 : index
    %149 = memref.load %arg2[%c12_38] : memref<16xf32, #tpu.memory_space<smem>>
    %150 = vector.broadcast %149 : f32 to vector<8x128xf32>
    %151 = arith.addf %148, %150 : vector<8x128xf32>
    %cst_39 = arith.constant 0.000000e+00 : f32
    %152 = vector.broadcast %cst_39 : f32 to vector<8x128xf32>
    %153 = arith.maximumf %151, %152 : vector<8x128xf32>
    %c12_40 = arith.constant 12 : index
    %154 = memref.load %arg3[%c12_40] : memref<16xf32, #tpu.memory_space<smem>>
    %155 = vector.broadcast %154 : f32 to vector<8x128xf32>
    %156 = arith.mulf %155, %153 : vector<8x128xf32>
    %157 = arith.addf %145, %156 : vector<8x128xf32>
    %c13 = arith.constant 13 : index
    %158 = memref.load %arg1[%c13] : memref<16xf32, #tpu.memory_space<smem>>
    %159 = vector.broadcast %158 : f32 to vector<8x128xf32>
    %160 = arith.mulf %0, %159 : vector<8x128xf32>
    %c13_41 = arith.constant 13 : index
    %161 = memref.load %arg2[%c13_41] : memref<16xf32, #tpu.memory_space<smem>>
    %162 = vector.broadcast %161 : f32 to vector<8x128xf32>
    %163 = arith.addf %160, %162 : vector<8x128xf32>
    %cst_42 = arith.constant 0.000000e+00 : f32
    %164 = vector.broadcast %cst_42 : f32 to vector<8x128xf32>
    %165 = arith.maximumf %163, %164 : vector<8x128xf32>
    %c13_43 = arith.constant 13 : index
    %166 = memref.load %arg3[%c13_43] : memref<16xf32, #tpu.memory_space<smem>>
    %167 = vector.broadcast %166 : f32 to vector<8x128xf32>
    %168 = arith.mulf %167, %165 : vector<8x128xf32>
    %169 = arith.addf %157, %168 : vector<8x128xf32>
    %c14 = arith.constant 14 : index
    %170 = memref.load %arg1[%c14] : memref<16xf32, #tpu.memory_space<smem>>
    %171 = vector.broadcast %170 : f32 to vector<8x128xf32>
    %172 = arith.mulf %0, %171 : vector<8x128xf32>
    %c14_44 = arith.constant 14 : index
    %173 = memref.load %arg2[%c14_44] : memref<16xf32, #tpu.memory_space<smem>>
    %174 = vector.broadcast %173 : f32 to vector<8x128xf32>
    %175 = arith.addf %172, %174 : vector<8x128xf32>
    %cst_45 = arith.constant 0.000000e+00 : f32
    %176 = vector.broadcast %cst_45 : f32 to vector<8x128xf32>
    %177 = arith.maximumf %175, %176 : vector<8x128xf32>
    %c14_46 = arith.constant 14 : index
    %178 = memref.load %arg3[%c14_46] : memref<16xf32, #tpu.memory_space<smem>>
    %179 = vector.broadcast %178 : f32 to vector<8x128xf32>
    %180 = arith.mulf %179, %177 : vector<8x128xf32>
    %181 = arith.addf %169, %180 : vector<8x128xf32>
    %c15 = arith.constant 15 : index
    %182 = memref.load %arg1[%c15] : memref<16xf32, #tpu.memory_space<smem>>
    %183 = vector.broadcast %182 : f32 to vector<8x128xf32>
    %184 = arith.mulf %0, %183 : vector<8x128xf32>
    %c15_47 = arith.constant 15 : index
    %185 = memref.load %arg2[%c15_47] : memref<16xf32, #tpu.memory_space<smem>>
    %186 = vector.broadcast %185 : f32 to vector<8x128xf32>
    %187 = arith.addf %184, %186 : vector<8x128xf32>
    %cst_48 = arith.constant 0.000000e+00 : f32
    %188 = vector.broadcast %cst_48 : f32 to vector<8x128xf32>
    %189 = arith.maximumf %187, %188 : vector<8x128xf32>
    %c15_49 = arith.constant 15 : index
    %190 = memref.load %arg3[%c15_49] : memref<16xf32, #tpu.memory_space<smem>>
    %191 = vector.broadcast %190 : f32 to vector<8x128xf32>
    %192 = arith.mulf %191, %189 : vector<8x128xf32>
    %193 = arith.addf %181, %192 : vector<8x128xf32>
    %c0_50 = arith.constant 0 : index
    %194 = memref.load %arg4[%c0_50] : memref<1xf32, #tpu.memory_space<smem>>
    %195 = vector.broadcast %194 : f32 to vector<8x128xf32>
    %196 = arith.addf %193, %195 : vector<8x128xf32>
    %cst_51 = arith.constant 0.000000e+00 : f32
    %197 = vector.broadcast %cst_51 : f32 to vector<8x128xf32>
    %198 = arith.subf %197, %196 : vector<8x128xf32>
    %199 = math.exp %198 : vector<8x128xf32>
    %cst_52 = arith.constant 1.000000e+00 : f32
    %200 = vector.broadcast %cst_52 : f32 to vector<8x128xf32>
    %201 = arith.addf %200, %199 : vector<8x128xf32>
    %cst_53 = arith.constant 1.000000e+00 : f32
    %202 = vector.broadcast %cst_53 : f32 to vector<8x128xf32>
    %203 = arith.divf %202, %201 : vector<8x128xf32>
    %c0_54 = arith.constant 0 : index
    %c0_55 = arith.constant 0 : index
    %204 = vector.load %arg6[%c0_54, %c0_55] : memref<8x128xf32, #tpu.memory_space<vmem>>, vector<8x128xf32>
    tpu.vector_store %arg6[%c0_54, %c0_55], %203 {strides = array<i32>} : memref<8x128xf32, #tpu.memory_space<vmem>>, vector<8x128xf32>,
    return
  }
  func.func @transform_0(%arg0: i32) -> i32 {
    %c0_i32 = arith.constant 0 : i32
    %c0_i32_0 = arith.constant 0 : i32
    return %c0_i32 : i32
  }
  func.func @transform_1(%arg0: i32) -> i32 {
    %c0_i32 = arith.constant 0 : i32
    %c0_i32_0 = arith.constant 0 : i32
    return %c0_i32 : i32
  }
  func.func @transform_2(%arg0: i32) -> i32 {
    %c0_i32 = arith.constant 0 : i32
    %c0_i32_0 = arith.constant 0 : i32
    return %c0_i32 : i32
  }
  func.func @transform_3(%arg0: i32) -> i32 {
    %c0_i32 = arith.constant 0 : i32
    %c0_i32_0 = arith.constant 0 : i32
    return %c0_i32 : i32
  }
  func.func @transform_4(%arg0: i32) -> (i32, i32) {
    %c0_i32 = arith.constant 0 : i32
    %c0_i32_0 = arith.constant 0 : i32
    return %arg0, %c0_i32 : i32, i32
  }
  func.func @transform_5(%arg0: i32) -> (i32, i32) {
    %c0_i32 = arith.constant 0 : i32
    %c0_i32_0 = arith.constant 0 : i32
    return %arg0, %c0_i32 : i32, i32
  }
}

</mosaic_0001>

<llo_original>
// kernel: tpu_custom_call.1
$region0: #{tpu_custom_call.1}
  #allocation0 [shape = 'u32[]', space=smem, size = 0x4, offset = 0x4, fixed_abs, tag = 'smem constant byte address 0x4 - core index']
  #allocation1 [shape = 'u32[144,128]{1,0:T(1,128)}', space=vmem, size = 0x12000, scoped, tag = 'internal scratch']
  #allocation2 [shape = 'f32[1]{0:T(128)S(6)}', space=smem, size = 0x200, scoped, tag = 'scoped memory for tpu_custom_call.1']
  %s0 = inlined_call_operand.vmem [shape: f32[16], index: 0, kind: input, shape index: {}]
  %s1 = inlined_call_operand.vmem [shape: f32[16], index: 1, kind: input, shape index: {}]
  %s2 = inlined_call_operand.vmem [shape: f32[16], index: 2, kind: input, shape index: {}]
  %s3 = inlined_call_operand.<no memory space> [shape: f32[1], index: 3, kind: input, shape index: {}]
  %s4 = inlined_call_operand.hbm [shape: f32[8,128], index: 4, kind: input, shape index: {}]
  %s5 = inlined_call_operand.hbm [shape: f32[8,128], index: 5, kind: output, shape index: {}]
  %s6 = sld [smem:[#allocation0]]
  $region46: #{tpu_custom_call.1} parent=0
    _
  %s8 = ssub.s32 1, %s6
  %s9 = scalar_select 0, %s8, %s6
  %10 = sst [smem:[#allocation2]] %s3
  $region1: #{tpu_custom_call.1} parent=0
    #allocation3 [shape = 'u8[512]{0}', space=smem, size = 0x200, scoped, tag = 'input window, operand 0, single buffered']
    #allocation4 [shape = 's32[1]{0}', space=sflag, size = 0x4, scoped, tag = 'scoped memory for tpu_custom_call.1']
    #allocation5 [shape = 's32[1]{0}', space=sflag, size = 0x4, scoped, tag = 'scoped memory for tpu_custom_call.1']
    #allocation6 [shape = 's32[1]{0}', space=sflag, size = 0x4, scoped, tag = 'scoped memory for tpu_custom_call.1']
    #allocation7 [shape = 'u8[512]{0}', space=smem, size = 0x200, scoped, tag = 'input window, operand 1, single buffered']
    #allocation8 [shape = 's32[1]{0}', space=sflag, size = 0x4, scoped, tag = 'scoped memory for tpu_custom_call.1']
    #allocation9 [shape = 'u8[512]{0}', space=smem, size = 0x200, scoped, tag = 'input window, operand 2, single buffered']
    #allocation10 [shape = 'u8[4096]{0}', space=vmem, size = 0x1000, scoped, tag = 'input window, operand 4, single buffered']
    #allocation11 [shape = 'u8[4096]{0}', space=vmem, size = 0x1000, scoped, tag = 'output window, operand 0, single buffered']
    %11 = vsyncpa [#allocation6], 0
    %12 = vsyncpa [#allocation8], 0
    %13 = vsyncpa [#allocation4], 0
    %14 = vsyncpa [#allocation5], 0
    // Predicated region
    $region2: #{tpu_custom_call.1} parent=1 // pred_check
      _
    $region3: #{tpu_custom_call.1} parent=1 // pred_check_branch
      %16 = sbr.rel (0) target = $region5
    $region4: #{tpu_custom_call.1} parent=1 // pred_region
      %s18 = ssub.s32 16, 16
      %19 = vsyncadd [#allocation6], %s18
      %s21 = sshll.u32 %s0, 4
      %s22 = int_to_ptr.vmem [resolvable:$true] %s21
      %24 = dma.vmem_to_smem %s22, 16, [#allocation3], [#allocation6]
    $region5: #{tpu_custom_call.1} parent=1 // pred_fallthru
      _
    // Predicated region
    $region6: #{tpu_custom_call.1} parent=1 // pred_check
      _
    $region7: #{tpu_custom_call.1} parent=1 // pred_check_branch
      %26 = sbr.rel (0) target = $region9
    $region8: #{tpu_custom_call.1} parent=1 // pred_region
      %s28 = ssub.s32 16, 16
      %29 = vsyncadd [#allocation8], %s28
      %s31 = sshll.u32 %s1, 4
      %s32 = int_to_ptr.vmem [resolvable:$true] %s31
      %34 = dma.vmem_to_smem %s32, 16, [#allocation7], [#allocation8]
    $region9: #{tpu_custom_call.1} parent=1 // pred_fallthru
      _
    // Predicated region
    $region10: #{tpu_custom_call.1} parent=1 // pred_check
      _
    $region11: #{tpu_custom_call.1} parent=1 // pred_check_branch
      %36 = sbr.rel (0) target = $region13
    $region12: #{tpu_custom_call.1} parent=1 // pred_region
      %s38 = ssub.s32 16, 16
      %39 = vsyncadd [#allocation8], %s38
      %s41 = sshll.u32 %s2, 4
      %s42 = int_to_ptr.vmem [resolvable:$true] %s41
      %44 = dma.vmem_to_smem %s42, 16, [#allocation9], [#allocation8]
    $region13: #{tpu_custom_call.1} parent=1 // pred_fallthru
      _
    // Predicated region
    $region14: #{tpu_custom_call.1} parent=1 // pred_check
      _
    $region15: #{tpu_custom_call.1} parent=1 // pred_check_branch
      %46 = sbr.rel (0) target = $region17
    $region16: #{tpu_custom_call.1} parent=1 // pred_region
      _
    $region17: #{tpu_custom_call.1} parent=1 // pred_fallthru
      _
    // Predicated region
    $region18: #{tpu_custom_call.1} parent=1 // pred_check
      _
    $region19: #{tpu_custom_call.1} parent=1 // pred_check_branch
      %48 = sbr.rel (0) target = $region21
    $region20: #{tpu_custom_call.1} parent=1 // pred_region
      %s50 = ssub.s32 128, 128
      %51 = vsyncadd [#allocation4], %s50
      %s53 = sshll.u32 [#allocation10], 4
      %s54 = int_to_ptr.vmem [resolvable:$true] %s53
      %56 = dma.hbm_to_vmem [thread:$0]  %s4, 128, %s54, [#allocation4]
    $region21: #{tpu_custom_call.1} parent=1 // pred_fallthru
      _
    // Predicated region
    $region22: #{tpu_custom_call.1} parent=1 // pred_check
      _
    $region23: #{tpu_custom_call.1} parent=1 // pred_check_branch
      %58 = sbr.rel (0) target = $region25
    $region24: #{tpu_custom_call.1} parent=1 // pred_region
      %59 = dma.done [#allocation6], 16
    $region25: #{tpu_custom_call.1} parent=1 // pred_fallthru
      _
    // Predicated region
    $region26: #{tpu_custom_call.1} parent=1 // pred_check
      _
    $region27: #{tpu_custom_call.1} parent=1 // pred_check_branch
      %61 = sbr.rel (0) target = $region29
    $region28: #{tpu_custom_call.1} parent=1 // pred_region
      %62 = dma.done [#allocation8], 16
    $region29: #{tpu_custom_call.1} parent=1 // pred_fallthru
      _
    // Predicated region
    $region30: #{tpu_custom_call.1} parent=1 // pred_check
      _
    $region31: #{tpu_custom_call.1} parent=1 // pred_check_branch
      %64 = sbr.rel (0) target = $region33
    $region32: #{tpu_custom_call.1} parent=1 // pred_region
      %65 = dma.done [#allocation8], 16
    $region33: #{tpu_custom_call.1} parent=1 // pred_fallthru
      _
    // Predicated region
    $region34: #{tpu_custom_call.1} parent=1 // pred_check
      _
    $region35: #{tpu_custom_call.1} parent=1 // pred_check_branch
      %67 = sbr.rel (0) target = $region37
    $region36: #{tpu_custom_call.1} parent=1 // pred_region
      %68 = dma.done [#allocation4], 128
    $region37: #{tpu_custom_call.1} parent=1 // pred_fallthru
      _
    %69 = sfence
    %v70 = vld [vmem:[#allocation10] sm:$0xff]
    %s71 = sld [smem:[#allocation3]]
    %v72 = vstv %s71
    %v73 = vmul.f32 %v70, %v72
    %s74 = sld [smem:[#allocation7]]
    %v75 = vstv %s74
    %v76 = vadd.f32 %v73, %v75
    %v77 = vmax.f32 %v76, 0.0
    %s78 = sld [smem:[#allocation9]]
    %v79 = vstv %s78
    %v80 = vmul.f32 %v79, %v77
    %v81 = vadd.f32 %v80, 0.0
    %s82 = sld [smem:[#allocation3 + $0x1]]
    %v83 = vstv %s82
    %v84 = vmul.f32 %v70, %v83
    %s85 = sld [smem:[#allocation7 + $0x1]]
    %v86 = vstv %s85
    %v87 = vadd.f32 %v84, %v86
    %v88 = vmax.f32 %v87, 0.0
    %s89 = sld [smem:[#allocation9 + $0x1]]
    %v90 = vstv %s89
    %v91 = vmul.f32 %v90, %v88
    %v92 = vadd.f32 %v81, %v91
    %s93 = sld [smem:[#allocation3 + $0x2]]
    %v94 = vstv %s93
    %v95 = vmul.f32 %v70, %v94
    %s96 = sld [smem:[#allocation7 + $0x2]]
    %v97 = vstv %s96
    %v98 = vadd.f32 %v95, %v97
    %v99 = vmax.f32 %v98, 0.0
    %s100 = sld [smem:[#allocation9 + $0x2]]
    %v101 = vstv %s100
    %v102 = vmul.f32 %v101, %v99
    %v103 = vadd.f32 %v92, %v102
    %s104 = sld [smem:[#allocation3 + $0x3]]
    %v105 = vstv %s104
    %v106 = vmul.f32 %v70, %v105
    %s107 = sld [smem:[#allocation7 + $0x3]]
    %v108 = vstv %s107
    %v109 = vadd.f32 %v106, %v108
    %v110 = vmax.f32 %v109, 0.0
    %s111 = sld [smem:[#allocation9 + $0x3]]
    %v112 = vstv %s111
    %v113 = vmul.f32 %v112, %v110
    %v114 = vadd.f32 %v103, %v113
    %s115 = sld [smem:[#allocation3 + $0x4]]
    %v116 = vstv %s115
    %v117 = vmul.f32 %v70, %v116
    %s118 = sld [smem:[#allocation7 + $0x4]]
    %v119 = vstv %s118
    %v120 = vadd.f32 %v117, %v119
    %v121 = vmax.f32 %v120, 0.0
    %s122 = sld [smem:[#allocation9 + $0x4]]
    %v123 = vstv %s122
    %v124 = vmul.f32 %v123, %v121
    %v125 = vadd.f32 %v114, %v124
    %s126 = sld [smem:[#allocation3 + $0x5]]
    %v127 = vstv %s126
    %v128 = vmul.f32 %v70, %v127
    %s129 = sld [smem:[#allocation7 + $0x5]]
    %v130 = vstv %s129
    %v131 = vadd.f32 %v128, %v130
    %v132 = vmax.f32 %v131, 0.0
    %s133 = sld [smem:[#allocation9 + $0x5]]
    %v134 = vstv %s133
    %v135 = vmul.f32 %v134, %v132
    %v136 = vadd.f32 %v125, %v135
    %s137 = sld [smem:[#allocation3 + $0x6]]
    %v138 = vstv %s137
    %v139 = vmul.f32 %v70, %v138
    %s140 = sld [smem:[#allocation7 + $0x6]]
    %v141 = vstv %s140
    %v142 = vadd.f32 %v139, %v141
    %v143 = vmax.f32 %v142, 0.0
    %s144 = sld [smem:[#allocation9 + $0x6]]
    %v145 = vstv %s144
    %v146 = vmul.f32 %v145, %v143
    %v147 = vadd.f32 %v136, %v146
    %s148 = sld [smem:[#allocation3 + $0x7]]
    %v149 = vstv %s148
    %v150 = vmul.f32 %v70, %v149
    %s151 = sld [smem:[#allocation7 + $0x7]]
    %v152 = vstv %s151
    %v153 = vadd.f32 %v150, %v152
    %v154 = vmax.f32 %v153, 0.0
    %s155 = sld [smem:[#allocation9 + $0x7]]
    %v156 = vstv %s155
    %v157 = vmul.f32 %v156, %v154
    %v158 = vadd.f32 %v147, %v157
    %s159 = sld [smem:[#allocation3 + $0x8]]
    %v160 = vstv %s159
    %v161 = vmul.f32 %v70, %v160
    %s162 = sld [smem:[#allocation7 + $0x8]]
    %v163 = vstv %s162
    %v164 = vadd.f32 %v161, %v163
    %v165 = vmax.f32 %v164, 0.0
    %s166 = sld [smem:[#allocation9 + $0x8]]
    %v167 = vstv %s166
    %v168 = vmul.f32 %v167, %v165
    %v169 = vadd.f32 %v158, %v168
    %s170 = sld [smem:[#allocation3 + $0x9]]
    %v171 = vstv %s170
    %v172 = vmul.f32 %v70, %v171
    %s173 = sld [smem:[#allocation7 + $0x9]]
    %v174 = vstv %s173
    %v175 = vadd.f32 %v172, %v174
    %v176 = vmax.f32 %v175, 0.0
    %s177 = sld [smem:[#allocation9 + $0x9]]
    %v178 = vstv %s177
    %v179 = vmul.f32 %v178, %v176
    %v180 = vadd.f32 %v169, %v179
    %s181 = sld [smem:[#allocation3 + $0xa]]
    %v182 = vstv %s181
    %v183 = vmul.f32 %v70, %v182
    %s184 = sld [smem:[#allocation7 + $0xa]]
    %v185 = vstv %s184
    %v186 = vadd.f32 %v183, %v185
    %v187 = vmax.f32 %v186, 0.0
    %s188 = sld [smem:[#allocation9 + $0xa]]
    %v189 = vstv %s188
    %v190 = vmul.f32 %v189, %v187
    %v191 = vadd.f32 %v180, %v190
    %s192 = sld [smem:[#allocation3 + $0xb]]
    %v193 = vstv %s192
    %v194 = vmul.f32 %v70, %v193
    %s195 = sld [smem:[#allocation7 + $0xb]]
    %v196 = vstv %s195
    %v197 = vadd.f32 %v194, %v196
    %v198 = vmax.f32 %v197, 0.0
    %s199 = sld [smem:[#allocation9 + $0xb]]
    %v200 = vstv %s199
    %v201 = vmul.f32 %v200, %v198
    %v202 = vadd.f32 %v191, %v201
    %s203 = sld [smem:[#allocation3 + $0xc]]
    %v204 = vstv %s203
    %v205 = vmul.f32 %v70, %v204
    %s206 = sld [smem:[#allocation7 + $0xc]]
    %v207 = vstv %s206
    %v208 = vadd.f32 %v205, %v207
    %v209 = vmax.f32 %v208, 0.0
    %s210 = sld [smem:[#allocation9 + $0xc]]
    %v211 = vstv %s210
    %v212 = vmul.f32 %v211, %v209
    %v213 = vadd.f32 %v202, %v212
    %s214 = sld [smem:[#allocation3 + $0xd]]
    %v215 = vstv %s214
    %v216 = vmul.f32 %v70, %v215
    %s217 = sld [smem:[#allocation7 + $0xd]]
    %v218 = vstv %s217
    %v219 = vadd.f32 %v216, %v218
    %v220 = vmax.f32 %v219, 0.0
    %s221 = sld [smem:[#allocation9 + $0xd]]
    %v222 = vstv %s221
    %v223 = vmul.f32 %v222, %v220
    %v224 = vadd.f32 %v213, %v223
    %s225 = sld [smem:[#allocation3 + $0xe]]
    %v226 = vstv %s225
    %v227 = vmul.f32 %v70, %v226
    %s228 = sld [smem:[#allocation7 + $0xe]]
    %v229 = vstv %s228
    %v230 = vadd.f32 %v227, %v229
    %v231 = vmax.f32 %v230, 0.0
    %s232 = sld [smem:[#allocation9 + $0xe]]
    %v233 = vstv %s232
    %v234 = vmul.f32 %v233, %v231
    %v235 = vadd.f32 %v224, %v234
    %s236 = sld [smem:[#allocation3 + $0xf]]
    %v237 = vstv %s236
    %v238 = vmul.f32 %v70, %v237
    %s239 = sld [smem:[#allocation7 + $0xf]]
    %v240 = vstv %s239
    %v241 = vadd.f32 %v238, %v240
    %v242 = vmax.f32 %v241, 0.0
    %s243 = sld [smem:[#allocation9 + $0xf]]
    %v244 = vstv %s243
    %v245 = vmul.f32 %v244, %v242
    %v246 = vadd.f32 %v235, %v245
    %s247 = sld [smem:[#allocation2]]
    %v248 = vstv %s247
    %v249 = vadd.f32 %v246, %v248
    %v250 = vsub.f32 0.0, %v249
    %v251 = vmul.f32 %v250, 1.442695
    %v252 = vpow.pop %v251
    %v253 = vadd.f32 %v252, 1.0
    %v254 = vrcp.pop %v253
    %v255 = vmul.f32 1.0, %v254
    %256 = vst [vmem:[#allocation11] sm:$0xff] %v255
    // Predicated region
    $region38: #{tpu_custom_call.1} parent=1 // pred_check
      _
    $region39: #{tpu_custom_call.1} parent=1 // pred_check_branch
      %258 = sbr.rel (0) target = $region41
    $region40: #{tpu_custom_call.1} parent=1 // pred_region
      %s260 = ssub.s32 128, 128
      %261 = vsyncadd [#allocation5], %s260
      %s263 = sshll.u32 [#allocation11], 4
      %s264 = int_to_ptr.vmem [resolvable:$true] %s263
      %266 = dma.vmem_to_hbm [thread:$0]  %s264, 128, %s5, [#allocation5]
    $region41: #{tpu_custom_call.1} parent=1 // pred_fallthru
      _
    // Predicated region
    $region42: #{tpu_custom_call.1} parent=1 // pred_check
      _
    $region43: #{tpu_custom_call.1} parent=1 // pred_check_branch
      %268 = sbr.rel (0) target = $region45
    $region44: #{tpu_custom_call.1} parent=1 // pred_region
      %269 = dma.done [#allocation5], 128
    $region45: #{tpu_custom_call.1} parent=1 // pred_fallthru
      _
    %270 = vsyncpa [#allocation4], 1
    %271 = vsyncpa [#allocation5], 1
    %272 = vsyncpa [#allocation6], 1
    %273 = vsyncpa [#allocation8], 1

</llo_original>
